<compile_context>
chip_gen: v6e
topology: v6e:2x2x1
jax: 0.10.0
libtpu: 0.0.40
codegen_flags: <defaults>
</compile_context>

<pallas_src>
import functools

import jax
import jax.numpy as jnp
from jax.experimental import pallas as pl
from jax.experimental.pallas import tpu as pltpu


def _cin_kernel(x_ref, gb_ref, o_ref, *, t_true):
    # x_ref:  (1, c_tile, T_pad)  input slab (possibly zero-padded in T)
    # gb_ref: (1, c_tile, 2)      packed [gamma, beta] per channel (f32)
    # o_ref:  (1, c_tile, T_pad)
    x = x_ref[0].astype(jnp.float32)               # (c_tile, T_pad)
    gb = gb_ref[0]                                 # (c_tile, 2)
    gamma = gb[:, 0:1]                             # (c_tile, 1)
    beta = gb[:, 1:2]                              # (c_tile, 1)

    # Single-pass statistics over the (padded) time axis.  Pad columns are
    # zero, so sums are exact; divide by the TRUE time length.
    inv_t = jnp.float32(1.0 / t_true)
    s1 = jnp.sum(x, axis=1, keepdims=True)         # (c_tile, 1)
    s2 = jnp.sum(x * x, axis=1, keepdims=True)     # (c_tile, 1)
    u = s1 * inv_t
    var = jnp.maximum(s2 * inv_t - u * u, 0.0)     # clamp against cancellation
    inv_std = jax.lax.rsqrt(var + 1e-8)            # (c_tile, 1)

    # Fused affine: (x - u) * inv_std * gamma + beta  ==  x * scale + shift.
    scale = inv_std * gamma
    shift = beta - u * scale
    o_ref[0] = (x * scale + shift).astype(o_ref.dtype)


def _sublane_granule(itemsize):
    # f32 -> 8 sublanes, bf16 -> 16, int8/fp8 -> 32 (packed sublanes).
    return {4: 8, 2: 16, 1: 32}.get(itemsize, 8)


def _pick_c_tile(B, C_pad, T_pad, itemsize,
                 max_block_bytes=2 << 20, min_steps=8):
    """Pick a channel tile: granule-multiple divisor of C_pad, block bytes
    <= max_block_bytes, and enough grid steps for pipelining / megacore."""
    granule = _sublane_granule(itemsize)
    cands = [c for c in range(granule, C_pad + 1, granule) if C_pad % c == 0]
    if not cands:                                  # defensive; C_pad is a granule multiple
        cands = [C_pad]

    # Largest candidate that respects the byte cap (smallest always allowed).
    best_idx = 0
    for i, c in enumerate(cands):
        if c * T_pad * itemsize <= max_block_bytes:
            best_idx = i

    # Shrink further until the grid has enough steps (or we hit the floor).
    while best_idx > 0 and B * (C_pad // cands[best_idx]) < min_steps:
        best_idx -= 1
    return cands[best_idx]


def conditional_instance_norm(x, c, w_gamma, b_gamma, w_beta, b_beta):
    """x: (B, C, T), c: (B, S), w_*: (C, S), b_*: (C,)."""
    B, C, T = x.shape
    out_dtype = x.dtype
    itemsize = jnp.dtype(out_dtype).itemsize
    granule = _sublane_granule(itemsize)

    # Hoisted style projection: one small XLA matmul per parameter set,
    # packed into a single (B, C, 2) tensor -> one param DMA per grid step.
    gamma = (c @ w_gamma.T + b_gamma).astype(jnp.float32)   # (B, C)
    beta = (c @ w_beta.T + b_beta).astype(jnp.float32)      # (B, C)
    gb = jnp.stack([gamma, beta], axis=-1)                  # (B, C, 2)

    # Pad C to a sublane granule and T to a lane multiple (128) so every
    # block is fully dense (no masked sublanes / vst.msk partial stores).
    C_pad = ((C + granule - 1) // granule) * granule
    T_pad = ((T + 127) // 128) * 128
    if C_pad != C or T_pad != T:
        x = jnp.pad(x, ((0, 0), (0, C_pad - C), (0, T_pad - T)))
    if C_pad != C:
        gb = jnp.pad(gb, ((0, 0), (0, C_pad - C), (0, 0)))

    c_tile = _pick_c_tile(B, C_pad, T_pad, itemsize)
    grid = (B, C_pad // c_tile)

    kernel = functools.partial(_cin_kernel, t_true=T)

    out = pl.pallas_call(
        kernel,
        out_shape=jax.ShapeDtypeStruct((B, C_pad, T_pad), out_dtype),
        grid_spec=pltpu.PrefetchScalarGridSpec(
            num_scalar_prefetch=0,
            grid=grid,
            in_specs=[
                pl.BlockSpec((1, c_tile, T_pad), lambda b, cb: (b, cb, 0)),  # x slab
                pl.BlockSpec((1, c_tile, 2), lambda b, cb: (b, cb, 0)),      # gamma/beta
            ],
            out_specs=pl.BlockSpec((1, c_tile, T_pad), lambda b, cb: (b, cb, 0)),
        ),
        compiler_params=pltpu.CompilerParams(
            dimension_semantics=("parallel", "parallel")),
        cost_estimate=pl.CostEstimate(
            flops=6 * B * C * T,
            transcendentals=B * C,
            bytes_accessed=2 * B * C_pad * T_pad * itemsize),
    )(x, gb)

    if C_pad != C or T_pad != T:
        out = out[:, :C, :T]
    return out


def _reference(x, c, w_gamma, b_gamma, w_beta, b_beta):
    u = jnp.mean(x, axis=2, keepdims=True)
    var = jnp.mean((x - u) * (x - u), axis=2, keepdims=True)
    std = jnp.sqrt(var + 1e-8)
    gamma = (c @ w_gamma.T + b_gamma)[:, :, None]
    beta = (c @ w_beta.T + b_beta)[:, :, None]
    return (x - u) / std * gamma + beta


if __name__ == "__main__":
    B, C, T, S = 2, 4, 16, 8   # batch, dim_in, time, style_num

    key = jax.random.PRNGKey(0)
    kx, kc, kwg, kbg, kwb, kbb = jax.random.split(key, 6)

    x = jax.random.normal(kx, (B, C, T), dtype=jnp.float32)
    c = jax.random.normal(kc, (B, S), dtype=jnp.float32)

    # Deterministic parameter init mimicking nn.Linear(style_num, dim_in):
    # weight (C, S), bias (C,), uniform(-1/sqrt(S), 1/sqrt(S)).
    bound = 1.0 / jnp.sqrt(jnp.float32(S))
    w_gamma = jax.random.uniform(kwg, (C, S), jnp.float32, -bound, bound)
    b_gamma = jax.random.uniform(kbg, (C,), jnp.float32, -bound, bound)
    w_beta = jax.random.uniform(kwb, (C, S), jnp.float32, -bound, bound)
    b_beta = jax.random.uniform(kbb, (C,), jnp.float32, -bound, bound)

    out = conditional_instance_norm(x, c, w_gamma, b_gamma, w_beta, b_beta)
    out = jax.block_until_ready(out)

    ref = _reference(x, c, w_gamma, b_gamma, w_beta, b_beta)
    assert out.shape == (B, C, T)
    assert jnp.allclose(out, ref, atol=1e-5, rtol=1e-5), "mismatch vs reference"

    print("KERNEL_OK")
</pallas_src>

<mosaic_0001>
module attributes {stable_mosaic.version = 11 : i64} {
  func.func @_cin_kernel(%arg0: i32, %arg1: i32, %arg2: memref<1x8x128xf32, #tpu.memory_space<vmem>>, %arg3: memref<1x8x2xf32, #tpu.memory_space<vmem>>, %arg4: memref<1x8x128xf32, #tpu.memory_space<vmem>>) attributes {dimension_semantics = [#tpu.dimension_semantics<parallel>, #tpu.dimension_semantics<parallel>], iteration_bounds = array<i64: 2, 1>, scalar_prefetch = 0 : i64, scratch_operands = 0 : i64, tpu.core_type = #tpu.core_type<tc>, window_params = [{transform_indices = @transform_0, window_bounds = array<i64: 1, 8, 128>}, {transform_indices = @transform_1, window_bounds = array<i64: 1, 8, 2>}, {transform_indices = @transform_2, window_bounds = array<i64: 1, 8, 128>}]} {
    %c0 = arith.constant 0 : index
    %c0_0 = arith.constant 0 : index
    %c0_1 = arith.constant 0 : index
    %0 = vector.load %arg2[%c0, %c0_0, %c0_1] : memref<1x8x128xf32, #tpu.memory_space<vmem>>, vector<1x8x128xf32>
    %1 = vector.shape_cast %0 : vector<1x8x128xf32> to vector<8x128xf32>
    %c0_2 = arith.constant 0 : index
    %c0_3 = arith.constant 0 : index
    %c0_4 = arith.constant 0 : index
    %2 = vector.load %arg3[%c0_2, %c0_3, %c0_4] : memref<1x8x2xf32, #tpu.memory_space<vmem>>, vector<1x8x2xf32>
    %3 = vector.shape_cast %2 : vector<1x8x2xf32> to vector<8x2xf32>
    %4 = vector.extract_strided_slice %3 {offsets = [0, 0], sizes = [8, 1], strides = [1, 1]} : vector<8x2xf32> to vector<8x1xf32>
    %5 = vector.extract_strided_slice %3 {offsets = [0, 1], sizes = [8, 1], strides = [1, 1]} : vector<8x2xf32> to vector<8x1xf32>
    %cst = arith.constant dense<0.000000e+00> : vector<8xf32>
    %6 = vector.multi_reduction <add>, %1, %cst [1] : vector<8x128xf32> to vector<8xf32>
    %7 = vector.shape_cast %6 : vector<8xf32> to vector<8x1xf32>
    %8 = arith.mulf %1, %1 : vector<8x128xf32>
    %cst_5 = arith.constant dense<0.000000e+00> : vector<8xf32>
    %9 = vector.multi_reduction <add>, %8, %cst_5 [1] : vector<8x128xf32> to vector<8xf32>
    %10 = vector.shape_cast %9 : vector<8xf32> to vector<8x1xf32>
    %cst_6 = arith.constant 6.250000e-02 : f32
    %11 = vector.broadcast %cst_6 : f32 to vector<8x1xf32>
    %12 = arith.mulf %7, %11 : vector<8x1xf32>
    %cst_7 = arith.constant 6.250000e-02 : f32
    %13 = vector.broadcast %cst_7 : f32 to vector<8x1xf32>
    %14 = arith.mulf %10, %13 : vector<8x1xf32>
    %15 = arith.mulf %12, %12 : vector<8x1xf32>
    %16 = arith.subf %14, %15 : vector<8x1xf32>
    %cst_8 = arith.constant 0.000000e+00 : f32
    %17 = vector.broadcast %cst_8 : f32 to vector<8x1xf32>
    %18 = arith.maximumf %16, %17 : vector<8x1xf32>
    %cst_9 = arith.constant 9.99999993E-9 : f32
    %19 = vector.broadcast %cst_9 : f32 to vector<8x1xf32>
    %20 = arith.addf %18, %19 : vector<8x1xf32>
    %21 = math.rsqrt %20 : vector<8x1xf32>
    %22 = arith.mulf %21, %4 : vector<8x1xf32>
    %23 = arith.mulf %12, %22 : vector<8x1xf32>
    %24 = arith.subf %5, %23 : vector<8x1xf32>
    %25 = vector.broadcast %22 : vector<8x1xf32> to vector<8x128xf32>
    %26 = arith.mulf %1, %25 : vector<8x128xf32>
    %27 = vector.broadcast %24 : vector<8x1xf32> to vector<8x128xf32>
    %28 = arith.addf %26, %27 : vector<8x128xf32>
    %c0_10 = arith.constant 0 : index
    %c0_11 = arith.constant 0 : index
    %c0_12 = arith.constant 0 : index
    %29 = vector.load %arg4[%c0_10, %c0_11, %c0_12] : memref<1x8x128xf32, #tpu.memory_space<vmem>>, vector<1x8x128xf32>
    %30 = vector.shape_cast %29 : vector<1x8x128xf32> to vector<8x128xf32>
    %31 = vector.shape_cast %28 : vector<8x128xf32> to vector<1x8x128xf32>
    tpu.vector_store %arg4[%c0_10, %c0_11, %c0_12], %31 {strides = array<i32>} : memref<1x8x128xf32, #tpu.memory_space<vmem>>, vector<1x8x128xf32>,
    return
  }
  func.func @transform_0(%arg0: i32, %arg1: i32) -> (i32, i32, i32) {
    %c0_i32 = arith.constant 0 : i32
    %c0_i32_0 = arith.constant 0 : i32
    return %arg0, %arg1, %c0_i32 : i32, i32, i32
  }
  func.func @transform_1(%arg0: i32, %arg1: i32) -> (i32, i32, i32) {
    %c0_i32 = arith.constant 0 : i32
    %c0_i32_0 = arith.constant 0 : i32
    return %arg0, %arg1, %c0_i32 : i32, i32, i32
  }
  func.func @transform_2(%arg0: i32, %arg1: i32) -> (i32, i32, i32) {
    %c0_i32 = arith.constant 0 : i32
    %c0_i32_0 = arith.constant 0 : i32
    return %arg0, %arg1, %c0_i32 : i32, i32, i32
  }
}

</mosaic_0001>

<llo_original>
// kernel: tpu_custom_call.1
$region0: #{tpu_custom_call.1}
  #allocation0 [shape = 'u32[]', space=smem, size = 0x4, offset = 0x4, fixed_abs, tag = 'smem constant byte address 0x4 - core index']
  #allocation1 [shape = 'u32[144,128]{1,0:T(1,128)}', space=vmem, size = 0x12000, scoped, tag = 'internal scratch']
  %s0 = inlined_call_operand.vmem [shape: f32[2,8,128], index: 0, kind: input, shape index: {}]
  %s1 = inlined_call_operand.vmem [shape: f32[2,8,2], index: 1, kind: input, shape index: {}]
  %s2 = inlined_call_operand.hbm [shape: f32[2,8,128], index: 2, kind: output, shape index: {}]
  %s3 = sld [smem:[#allocation0]]
  $region41: #{tpu_custom_call.1} parent=0
    _
  %s5 = ssub.s32 1, %s3
  %s6 = scalar_select 0, %s5, %s3
  $region1: #{tpu_custom_call.1} parent=0
    #allocation2 [shape = 'u8[8192]{0}', space=vmem, size = 0x2000, scoped, tag = 'output window, operand 0']
    #allocation3 [shape = 's32[2]{0}', space=sflag, size = 0x8, scoped, tag = 'scoped memory for tpu_custom_call.1']
    %7 = vsyncpa [#allocation3], 0
    %s8 = scalar_lea.sflag [#allocation3], 1
    %9 = vsyncpa %s8, 0
    loop: start=0, step=1, limit=4
    $region2: #{tpu_custom_call.1} parent=1 // loop_pre_header
      _
    $region3: #{tpu_custom_call.1} parent=1 // loop_header
      %s11 = sphi 0, %s15
      %p12 = scmp.ge.s32.totalorder %s11, 4
      %s18 = sphi 0, %s30
      %s19 = sphi 0, %s26
      %s20 = sphi 0, %s18
      %s21 = sphi 0, %s19
      %s22 = sphi 0, %s20
      %s23 = sphi 0, %s21
      %s35 = sphi 0, %s37
      %s38 = sphi 0, %s35
      %s39 = sphi 0, %s38
      %s55 = sphi 0, %s39
      %s63 = sphi 0, %s65
      %s66 = sphi 0, %s63
      %s67 = sphi 0, %s66
      %s83 = sphi 0, %s67
      %s91 = sphi 0, %s93
      %s94 = sphi 0, %s91
      %s95 = sphi 0, %s94
      %s111 = sphi 0, %s95
    $region4: #{tpu_custom_call.1} parent=1 // loop_header_branch
      %14 = sbr.rel (%p12) target = $region8
    $region5: #{tpu_custom_call.1} parent=1 // loop_body
      %s16 = ssub.s32 %s11, 1
      %s17 = ssub.s32 %s11, 2
      %s24 = sadd.s32 1, %s19
      %p25 = scmp.ge.s32.totalorder %s24, 1
      %s26 = scalar_select %p25, 0, %s24
      %s27 = sadd.s32 1, %s18
      %s28 = scalar_select %p25, %s27, %s18
      %p29 = scmp.ge.s32.totalorder %s28, 2
      %s30 = scalar_select %p29, 0, %s28
      %s31 = ssub.s32 %s18, %s30
      %s32 = ssub.s32 %s19, %s26
      %s33 = sor.u32 %s31, %s32
      %p34 = scmp.eq.s32.totalorder %s33, 0
      %s36 = sadd.s32 %s35, 1
      %s37 = scalar_select %p34, %s35, %s36
      %p40 = pneg %p34
      %p41 = scmp.eq.s32.totalorder %s11, 1
      %p42 = por %p40, %p41
      %p43 = scmp.ne.s32.totalorder %s35, %s38
      %p44 = scmp.eq.s32.totalorder %s11, 0
      %p45 = por %p43, %p44
      %p46 = scmp.ne.s32.totalorder %s35, %s38
      %p47 = scmp.eq.s32.totalorder %s16, 1
      %p48 = por %p46, %p47
      %p49 = scmp.ne.s32.totalorder %s38, %s39
      %p50 = scmp.eq.s32.totalorder %s16, 0
      %p51 = por %p49, %p50
      %p52 = scmp.ne.s32.totalorder %s38, %s39
      %p53 = scmp.eq.s32.totalorder %s17, 1
      %p54 = por %p52, %p53
      %p56 = scmp.ne.s32.totalorder %s39, %s55
      %p57 = scmp.eq.s32.totalorder %s17, 0
      %p58 = por %p56, %p57
      %s59 = ssub.s32 %s18, %s30
      %s60 = ssub.s32 %s19, %s26
      %s61 = sor.u32 %s59, %s60
      %p62 = scmp.eq.s32.totalorder %s61, 0
      %s64 = sadd.s32 %s63, 1
      %s65 = scalar_select %p62, %s63, %s64
      %p68 = pneg %p62
      %p69 = scmp.eq.s32.totalorder %s11, 1
      %p70 = por %p68, %p69
      %p71 = scmp.ne.s32.totalorder %s63, %s66
      %p72 = scmp.eq.s32.totalorder %s11, 0
      %p73 = por %p71, %p72
      %p74 = scmp.ne.s32.totalorder %s63, %s66
      %p75 = scmp.eq.s32.totalorder %s16, 1
      %p76 = por %p74, %p75
      %p77 = scmp.ne.s32.totalorder %s66, %s67
      %p78 = scmp.eq.s32.totalorder %s16, 0
      %p79 = por %p77, %p78
      %p80 = scmp.ne.s32.totalorder %s66, %s67
      %p81 = scmp.eq.s32.totalorder %s17, 1
      %p82 = por %p80, %p81
      %p84 = scmp.ne.s32.totalorder %s67, %s83
      %p85 = scmp.eq.s32.totalorder %s17, 0
      %p86 = por %p84, %p85
      %s87 = ssub.s32 %s18, %s30
      %s88 = ssub.s32 %s19, %s26
      %s89 = sor.u32 %s87, %s88
      %p90 = scmp.eq.s32.totalorder %s89, 0
      %s92 = sadd.s32 %s91, 1
      %s93 = scalar_select %p90, %s91, %s92
      %p96 = pneg %p90
      %p97 = scmp.eq.s32.totalorder %s11, 1
      %p98 = por %p96, %p97
      %p99 = scmp.ne.s32.totalorder %s91, %s94
      %p100 = scmp.eq.s32.totalorder %s11, 0
      %p101 = por %p99, %p100
      %p102 = scmp.ne.s32.totalorder %s91, %s94
      %p103 = scmp.eq.s32.totalorder %s16, 1
      %p104 = por %p102, %p103
      %p105 = scmp.ne.s32.totalorder %s94, %s95
      %p106 = scmp.eq.s32.totalorder %s16, 0
      %p107 = por %p105, %p106
      %p108 = scmp.ne.s32.totalorder %s94, %s95
      %p109 = scmp.eq.s32.totalorder %s17, 1
      %p110 = por %p108, %p109
      %p112 = scmp.ne.s32.totalorder %s95, %s111
      %p113 = scmp.eq.s32.totalorder %s17, 0
      %p114 = por %p112, %p113
      %p115 = scmp.le.s32.totalorder 1, %s11
      %p116 = scmp.lt.s32.totalorder %s11, 3
      %p117 = pnand %p115, %p116
      %p118 = pneg %p117
      // Predicated region
      $region9: #{tpu_custom_call.1} parent=5 // pred_check
        _
      $region10: #{tpu_custom_call.1} parent=5 // pred_check_branch
        %120 = sbr.rel (%p117) target = $region12
      $region11: #{tpu_custom_call.1} parent=5 // pred_region
        %s121 = ssub.s32 %s11, 1
      $region12: #{tpu_custom_call.1} parent=5 // pred_fallthru
        _
      %p122 = scmp.lt.s32.totalorder %s11, 2
      // Predicated region
      $region13: #{tpu_custom_call.1} parent=5 // pred_check
        %p123 = pneg %p122
      $region14: #{tpu_custom_call.1} parent=5 // pred_check_branch
        %125 = sbr.rel (%p123) target = $region16
      $region15: #{tpu_custom_call.1} parent=5 // pred_region
        // Predicated region
        $region17: #{tpu_custom_call.1} parent=15 // pred_check
          %p126 = pneg %p45
        $region18: #{tpu_custom_call.1} parent=15 // pred_check_branch
          %128 = sbr.rel (%p126) target = $region20
        $region19: #{tpu_custom_call.1} parent=15 // pred_region
          %p129 = scmp.lt.s32.totalorder %s18, 1
          %s130 = scalar_select %p129, %s18, 1
          %p131 = scmp.lt.s32.totalorder %s19, 0
          %s132 = scalar_select %p131, %s19, 0
          %s133 = sadd.s32 %s132, %s130
          %s134 = smul.addr %s133, 8
          %s135 = scalar_lea.vmem %s0, %s134
        $region20: #{tpu_custom_call.1} parent=15 // pred_fallthru
          _
        // Predicated region
        $region21: #{tpu_custom_call.1} parent=15 // pred_check
          %p136 = pneg %p73
        $region22: #{tpu_custom_call.1} parent=15 // pred_check_branch
          %138 = sbr.rel (%p136) target = $region24
        $region23: #{tpu_custom_call.1} parent=15 // pred_region
          %p139 = scmp.lt.s32.totalorder %s18, 1
          %s140 = scalar_select %p139, %s18, 1
          %p141 = scmp.lt.s32.totalorder %s19, 0
          %s142 = scalar_select %p141, %s19, 0
          %s143 = sadd.s32 %s142, %s140
          %s144 = smul.addr %s143, 8
          %s145 = scalar_lea.vmem %s1, %s144
        $region24: #{tpu_custom_call.1} parent=15 // pred_fallthru
          _
      $region16: #{tpu_custom_call.1} parent=5 // pred_fallthru
        _
      %p146 = scmp.le.s32.totalorder 1, %s11
      %p147 = scmp.lt.s32.totalorder %s11, 3
      %p148 = pnand %p146, %p147
      %p149 = pneg %p148
      // Predicated region
      $region25: #{tpu_custom_call.1} parent=5 // pred_check
        _
      $region26: #{tpu_custom_call.1} parent=5 // pred_check_branch
        %151 = sbr.rel (%p148) target = $region28
      $region27: #{tpu_custom_call.1} parent=5 // pred_region
        %s152 = ssub.s32 %s11, 1
        %p153 = scmp.lt.s32.totalorder %s20, 1
        %s154 = scalar_select %p153, %s20, 1
        %p155 = scmp.lt.s32.totalorder %s21, 0
        %s156 = scalar_select %p155, %s21, 0
        %s157 = sadd.s32 %s156, %s154
        %s158 = smul.addr %s157, 8
        %s159 = scalar_lea.vmem %s0, %s158
        %p160 = pneg %p51
        %p161 = pneg %p48
        %p162 = scmp.lt.s32.totalorder %s20, 1
        %s163 = scalar_select %p162, %s20, 1
        %p164 = scmp.lt.s32.totalorder %s21, 0
        %s165 = scalar_select %p164, %s21, 0
        %s166 = sadd.s32 %s165, %s163
        %s167 = smul.addr %s166, 8
        %s168 = scalar_lea.vmem %s1, %s167
        %p169 = pneg %p79
        %p170 = pneg %p76
        %p171 = pneg %p107
        %p172 = pneg %p104
        %s173 = sand.u32 %s94, 1
        %s174 = scalar_lea.sflag [#allocation3], %s173
        %s175 = sand.u32 %s94, 1
        %s176 = smul.addr %s175, 8
        %s177 = scalar_lea.vmem [#allocation2], %s176
        %p178 = scmp.lt.s32.totalorder %s20, 1
        %s179 = scalar_select %p178, %s20, 1
        %p180 = scmp.lt.s32.totalorder %s21, 0
        %s181 = scalar_select %p180, %s21, 0
        %s182 = sadd.s32 %s181, %s179
        %s183 = smul.addr %s182, 8
        %s184 = scalar_lea.vmem %s0, %s183
        %p185 = scmp.lt.s32.totalorder %s20, 1
        %s186 = scalar_select %p185, %s20, 1
        %p187 = scmp.lt.s32.totalorder %s21, 0
        %s188 = scalar_select %p187, %s21, 0
        %s189 = sadd.s32 %s188, %s186
        %s190 = smul.addr %s189, 8
        %s191 = scalar_lea.vmem %s1, %s190
        %v192 = vld [vmem:[%s184] sm:$0xff]
        %v193 = vld [vmem:[%s191] sm:$0xff]
        %194 = vadd.xlane.f32.xlu0 %v192
        %v195 = vpop.xlane.xlu0 %194
        %v196 = vmul.f32 %v192, %v192
        %197 = vadd.xlane.f32.xlu0 %v196
        %v198 = vpop.xlane.xlu0 %197
        %v199 = vmul.f32 %v195, 0.0625
        %v200 = vmul.f32 %v198, 0.0625
        %v201 = vmul.f32 %v199, %v199
        %v202 = vsub.f32 %v200, %v201
        %v203 = vmax.f32 %v202, 0.0
        %v204 = vadd.f32 %v203, 1e-08
        %v205 = vrsqrt.pop %v204
        %v206 = vmul.f32 %v205, %v193
        %v207 = vmul.f32 %v199, %v206
        %209 = vrot.lane.b32.xlu0 %v207, 1
        %v210 = vpop.permute.xlu0 %209
        %v212 = vsub.f32 %v193, %v210
        %214 = vset.pattern.permute.xlu0 0
        %215 = vperm.xlu0 %214, %v206
        %v216 = vpop.permute.xlu0 %215
        %v218 = vmul.f32 %v192, %v216
        %220 = vset.pattern.permute.xlu0 1
        %221 = vperm.xlu0 %220, %v212
        %v222 = vpop.permute.xlu0 %221
        %v224 = vadd.f32 %v218, %v222
        %225 = vst [vmem:[%s177] sm:$0xff] %v224
        %s226 = sand.u32 %s94, 1
        %s227 = scalar_lea.sflag [#allocation3], %s226
        %s228 = sand.u32 %s94, 1
        %s229 = smul.addr %s228, 8
        %s230 = scalar_lea.vmem [#allocation2], %s229
        // Predicated region
        $region29: #{tpu_custom_call.1} parent=27 // pred_check
          %p231 = pneg %p104
        $region30: #{tpu_custom_call.1} parent=27 // pred_check_branch
          %233 = sbr.rel (%p231) target = $region32
        $region31: #{tpu_custom_call.1} parent=27 // pred_region
          %s235 = ssub.s32 128, 128
          %236 = vsyncadd %s227, %s235
          %s237 = sadd.s32 %s21, %s20
          %s238 = smul.addr %s237, 128
          %s239 = scalar_lea.hbm %s2, %s238
          %s241 = sshll.u32 %s230, 4
          %s242 = int_to_ptr.vmem [resolvable:$true] %s241
          %244 = dma.vmem_to_hbm [thread:$0]  %s242, 128, %s239, %s227
        $region32: #{tpu_custom_call.1} parent=27 // pred_fallthru
          _
      $region28: #{tpu_custom_call.1} parent=5 // pred_fallthru
        _
      %p245 = scmp.le.s32.totalorder 2, %s11
      // Predicated region
      $region33: #{tpu_custom_call.1} parent=5 // pred_check
        %p246 = pneg %p245
      $region34: #{tpu_custom_call.1} parent=5 // pred_check_branch
        %248 = sbr.rel (%p246) target = $region36
      $region35: #{tpu_custom_call.1} parent=5 // pred_region
        %s249 = ssub.s32 %s11, 2
        // Predicated region
        $region37: #{tpu_custom_call.1} parent=35 // pred_check
          %p250 = pneg %p110
        $region38: #{tpu_custom_call.1} parent=35 // pred_check_branch
          %252 = sbr.rel (%p250) target = $region40
        $region39: #{tpu_custom_call.1} parent=35 // pred_region
          %s253 = sand.u32 %s95, 1
          %s254 = scalar_lea.sflag [#allocation3], %s253
          %s255 = sand.u32 %s95, 1
          %s256 = smul.addr %s255, 8
          %s257 = scalar_lea.vmem [#allocation2], %s256
          %258 = dma.done %s254, 128
        $region40: #{tpu_custom_call.1} parent=35 // pred_fallthru
          _
      $region36: #{tpu_custom_call.1} parent=5 // pred_fallthru
        _
    $region6: #{tpu_custom_call.1} parent=1 // loop_footer
      %s15 = sadd.s32 1, %s11
    $region7: #{tpu_custom_call.1} parent=1 // loop_footer_branch
      %10 = sbr.rel target = $region3
    $region8: #{tpu_custom_call.1} parent=1 // loop_exit
      _
    %259 = vsyncpa [#allocation3], 1
    %s260 = scalar_lea.sflag [#allocation3], 1
    %261 = vsyncpa %s260, 1

</llo_original>
